<compile_context>
chip_gen: v6e
topology: v6e:2x2x1
jax: 0.10.0
libtpu: 0.0.40
codegen_flags: <defaults>
</compile_context>

<pallas_src>
import functools

import jax
import jax.numpy as jnp
import numpy as np
from jax.experimental import pallas as pl
from jax.experimental.pallas import tpu as pltpu

KERNEL_MUL = 2.0
KERNEL_NUM = 5
EPS = 1e-9


def _mmd_block_kernel(src_ref, tgt_ref, out_ref, *, TP, K, kernel_mul,
                      kernel_num, margin):
    """Process TP groups (each K source + K target rows) in one grid step.

    src_ref: (1, TP*K, D) VMEM  -- source (RGB) rows of this block's groups
    tgt_ref: (1, TP*K, D) VMEM  -- target (IR) rows of this block's groups
    out_ref: (1, 6, TP)   VMEM  -- per-group scalars, groups in lanes:
        row 0: group loss (margin hinge applied if margin is not None)
        row 1: mean(XX)  row 2: mean(YY)  row 3: mean(XY)  row 4: mean(YX)
        row 5: max(L2) of the group (wrapper keeps group P-1, matching torch)
    """
    H = TP * K          # rows per modality in this block
    M = 2 * H           # flattened sample count in this block
    n = 2 * K           # samples per group

    src = src_ref[0]                                         # (H, D)
    tgt = tgt_ref[0]                                         # (H, D)
    total = jnp.concatenate([src, tgt], axis=0)              # (M, D), VMEM only

    # --- one MXU-dense Gram for all TP groups ------------------------------
    gram = jax.lax.dot_general(
        total, total, (((1,), (1,)), ((), ())),
        precision=jax.lax.Precision.HIGHEST,
        preferred_element_type=jnp.float32)                  # (M, M)

    ri = jax.lax.broadcasted_iota(jnp.int32, (M, M), 0)
    ci = jax.lax.broadcasted_iota(jnp.int32, (M, M), 1)
    eye = ri == ci
    col_src = ci < H

    gdiag = jnp.where(eye, gram, 0.0)
    sq_row = jnp.sum(gdiag, axis=1, keepdims=True)           # (M, 1) ||x_i||^2
    sq_col = jnp.sum(gdiag, axis=0, keepdims=True)           # (1, M) ||x_j||^2

    l2 = jnp.maximum(sq_row + sq_col - 2.0 * gram, 0.0)      # cancellation clamp
    l2 = jnp.where(eye, 0.0, l2)                             # exact-zero diagonal

    # --- group-membership selectors (no integer division) ------------------
    rgi = jax.lax.broadcasted_iota(jnp.int32, (M, TP), 0)    # row index
    gk = jax.lax.broadcasted_iota(jnp.int32, (M, TP), 1) * K  # g*K
    sel_src = ((rgi >= gk) & (rgi < gk + K)).astype(jnp.float32)
    sel_tgt = ((rgi >= gk + H) & (rgi < gk + H + K)).astype(jnp.float32)
    sel = sel_src + sel_tgt                                   # row i in group g

    # block-diagonal (same-group) {0,1} mask: sel @ sel^T
    same = jax.lax.dot_general(sel, sel, (((1,), (1,)), ((), ())),
                               preferred_element_type=jnp.float32)  # (M, M)

    l2_same = l2 * same

    # --- per-group bandwidth (same formula as the torch module) ------------
    row_l2 = jnp.sum(l2_same, axis=1, keepdims=True)          # (M, 1)
    bw_sum = jnp.sum(sel * row_l2, axis=0, keepdims=True)     # (1, TP)
    bw = bw_sum / float(n * n - n) / (kernel_mul ** (kernel_num // 2))
    bw_row = jnp.sum(sel * bw, axis=1, keepdims=True)         # (M, 1)

    # --- multi-bandwidth RBF sum (negate the tiny reciprocal, not the tile) -
    kern = None
    for i in range(kernel_num):
        neg_inv = -1.0 / (bw_row * (kernel_mul ** i) + EPS)   # (M, 1)
        term = jnp.exp(l2 * neg_inv)
        kern = term if kern is None else kern + term

    # --- quadrant sums: two-stage reduction ---------------------------------
    k_same = kern * same
    cs_all = jnp.sum(k_same, axis=1, keepdims=True)                       # (M,1)
    cs_src = jnp.sum(jnp.where(col_src, k_same, 0.0), axis=1, keepdims=True)
    cs_tgt = cs_all - cs_src

    s_xx = jnp.sum(sel_src * cs_src, axis=0, keepdims=True)   # (1, TP)
    s_xy = jnp.sum(sel_src * cs_tgt, axis=0, keepdims=True)
    s_yx = jnp.sum(sel_tgt * cs_src, axis=0, keepdims=True)
    s_yy = jnp.sum(sel_tgt * cs_tgt, axis=0, keepdims=True)

    inv_kk = 1.0 / float(K * K)
    xx = s_xx * inv_kk
    yy = s_yy * inv_kk
    xy = s_xy * inv_kk
    yx = s_yx * inv_kk

    # mean(XX + YY - XY - YX) == mean(XX)+mean(YY)-mean(XY)-mean(YX)
    gl = xx + yy - xy - yx
    if margin is not None:
        # torch: add loss if loss - margin > 0, else clamp(loss-margin, 0) == 0
        gl = jnp.where(gl - margin > 0.0, gl, 0.0)

    # --- per-group max(L2) (values are >= 0, so multiplicative masking works)
    row_max = jnp.max(l2_same, axis=1, keepdims=True)         # (M, 1)
    gmax = jnp.max(sel * row_max, axis=0, keepdims=True)      # (1, TP)

    out_ref[0] = jnp.concatenate([gl, xx, yy, xy, yx, gmax], axis=0)  # (6, TP)


def margin_mmd_loss(source, target, *, P=4, K=4, kernel_mul=KERNEL_MUL,
                    kernel_num=KERNEL_NUM, margin=None, tp=None):
    source = jnp.asarray(source, jnp.float32)
    target = jnp.asarray(target, jnp.float32)
    assert source.shape == target.shape
    assert source.shape[0] == P * K
    D = source.shape[1]

    if tp is None:
        # Largest divisor of P keeping the flattened block M = 2*tp*K small
        # enough that the ~(M, M) f32 temporaries stay well inside VMEM while
        # packing lanes densely.
        tp = 1
        for cand in range(1, P + 1):
            if P % cand == 0 and 2 * cand * K <= 256:
                tp = cand
    assert P % tp == 0
    nb = P // tp
    H = tp * K
    M = 2 * H

    # Free reshapes (contiguous); no source/target concat is written to HBM.
    src3 = source.reshape(nb, H, D)
    tgt3 = target.reshape(nb, H, D)

    kernel = functools.partial(_mmd_block_kernel, TP=tp, K=K,
                               kernel_mul=kernel_mul, kernel_num=kernel_num,
                               margin=margin)

    # Explicit VMEM budget: double-buffered inputs + ~(M, M) intermediates.
    vmem_est = 4 * (8 * H * D + 24 * M * M + 8 * 6 * tp) + (2 << 20)
    vmem_limit = int(min(max(vmem_est, 4 << 20), 128 << 20))

    out = pl.pallas_call(
        kernel,
        out_shape=jax.ShapeDtypeStruct((nb, 6, tp), jnp.float32),
        grid=(nb,),
        in_specs=[pl.BlockSpec((1, H, D), lambda i: (i, 0, 0)),
                  pl.BlockSpec((1, H, D), lambda i: (i, 0, 0))],
        out_specs=pl.BlockSpec((1, 6, tp), lambda i: (i, 0, 0)),
        compiler_params=pltpu.CompilerParams(
            dimension_semantics=("parallel",),
            vmem_limit_bytes=vmem_limit),
    )(src3, tgt3)

    # (nb, 6, tp) -> (6, P): column p is global group p = block*tp + lane.
    stats_mat = jnp.transpose(out, (1, 0, 2)).reshape(6, P)

    total_loss = jnp.reshape(jnp.sum(stats_mat[0]) / P, (1,))   # torch: shape (1,)
    max_l2_last = stats_mat[5, P - 1]    # torch.max(l2dist) of the LAST group
    stats = [jnp.sum(stats_mat[1]) / P, jnp.sum(stats_mat[2]) / P,
             jnp.sum(stats_mat[3]) / P, jnp.sum(stats_mat[4]) / P]
    return total_loss, max_l2_last, stats


def _reference(source, target, P, K, kernel_mul, kernel_num, margin=None):
    """Pure-JAX re-implementation of the PyTorch forward for verification."""
    total_loss = jnp.float32(0.0)
    xx_b = yy_b = xy_b = yx_b = jnp.float32(0.0)
    last_max = jnp.float32(0.0)
    for p in range(P):
        s = source[p * K:(p + 1) * K]
        t = target[p * K:(p + 1) * K]
        tot = jnp.concatenate([s, t], axis=0)
        n = 2 * K
        l2 = jnp.sum((tot[None, :, :] - tot[:, None, :]) ** 2, axis=2)
        bw = jnp.sum(l2) / (n * n - n) / (kernel_mul ** (kernel_num // 2))
        kern = sum(jnp.exp(-l2 / (bw * kernel_mul ** i + EPS))
                   for i in range(kernel_num))
        XX, YY = kern[:K, :K], kern[K:, K:]
        XY, YX = kern[:K, K:], kern[K:, :K]
        xx_b += XX.mean(); yy_b += YY.mean()
        xy_b += XY.mean(); yx_b += YX.mean()
        loss = jnp.mean(XX + YY - XY - YX)
        if margin is not None:
            loss = jnp.where(loss - margin > 0.0, loss, 0.0)
        total_loss += loss
        last_max = jnp.max(l2)
    return (total_loss / P, last_max,
            [xx_b / P, yy_b / P, xy_b / P, yx_b / P])


if __name__ == "__main__":
    P, K, D = 4, 4, 32
    key = jax.random.PRNGKey(0)
    k1, k2 = jax.random.split(key)
    source = jax.random.normal(k1, (P * K, D), dtype=jnp.float32)
    target = jax.random.normal(k2, (P * K, D), dtype=jnp.float32) + 0.5

    # --- no-margin path, multi-step grid (tp=2 -> 2 grid steps) -------------
    loss, max_l2, stats = margin_mmd_loss(source, target, P=P, K=K, tp=2)
    jax.block_until_ready((loss, max_l2, stats))

    ref_loss, ref_max, ref_stats = _reference(source, target, P, K,
                                              KERNEL_MUL, KERNEL_NUM)
    np.testing.assert_allclose(np.asarray(loss)[0], float(ref_loss),
                               rtol=2e-4, atol=2e-4)
    np.testing.assert_allclose(float(max_l2), float(ref_max),
                               rtol=2e-4, atol=2e-4)
    for a, b in zip(stats, ref_stats):
        np.testing.assert_allclose(float(a), float(b), rtol=2e-4, atol=2e-4)

    # --- margin path, default block choice (tp=P -> single grid step) -------
    loss_m, max_l2_m, stats_m = margin_mmd_loss(source, target, P=P, K=K,
                                                margin=0.5)
    jax.block_until_ready((loss_m, max_l2_m, stats_m))
    ref_loss_m, ref_max_m, ref_stats_m = _reference(source, target, P, K,
                                                    KERNEL_MUL, KERNEL_NUM,
                                                    margin=0.5)
    np.testing.assert_allclose(np.asarray(loss_m)[0], float(ref_loss_m),
                               rtol=2e-4, atol=2e-4)
    np.testing.assert_allclose(float(max_l2_m), float(ref_max_m),
                               rtol=2e-4, atol=2e-4)
    for a, b in zip(stats_m, ref_stats_m):
        np.testing.assert_allclose(float(a), float(b), rtol=2e-4, atol=2e-4)

    print("KERNEL_OK")
</pallas_src>

<mosaic_0001>
module attributes {stable_mosaic.version = 11 : i64} {
  func.func @_mmd_block_kernel(%arg0: i32, %arg1: memref<1x8x32xf32, #tpu.memory_space<vmem>>, %arg2: memref<1x8x32xf32, #tpu.memory_space<vmem>>, %arg3: memref<1x6x2xf32, #tpu.memory_space<vmem>>) attributes {dimension_semantics = [#tpu.dimension_semantics<parallel>], iteration_bounds = array<i64: 2>, scalar_prefetch = 0 : i64, scratch_operands = 0 : i64, tpu.core_type = #tpu.core_type<tc>, window_params = [{transform_indices = @transform_0, window_bounds = array<i64: 1, 8, 32>}, {transform_indices = @transform_1, window_bounds = array<i64: 1, 8, 32>}, {transform_indices = @transform_2, window_bounds = array<i64: 1, 6, 2>}]} {
    %c0 = arith.constant 0 : index
    %c0_0 = arith.constant 0 : index
    %c0_1 = arith.constant 0 : index
    %0 = vector.load %arg1[%c0, %c0_0, %c0_1] : memref<1x8x32xf32, #tpu.memory_space<vmem>>, vector<1x8x32xf32>
    %1 = vector.shape_cast %0 : vector<1x8x32xf32> to vector<8x32xf32>
    %c0_2 = arith.constant 0 : index
    %c0_3 = arith.constant 0 : index
    %c0_4 = arith.constant 0 : index
    %2 = vector.load %arg2[%c0_2, %c0_3, %c0_4] : memref<1x8x32xf32, #tpu.memory_space<vmem>>, vector<1x8x32xf32>
    %3 = vector.shape_cast %2 : vector<1x8x32xf32> to vector<8x32xf32>
    %4 = tpu.concatenate %1, %3 in 0 : vector<8x32xf32>, vector<8x32xf32> -> vector<16x32xf32>
    %cst = arith.constant dense<0.000000e+00> : vector<16x16xf32>
    %5 = tpu.matmul %4, %4, %cst {dimension_numbers = #tpu.dot_dimension_numbers<[1], [1], [0], [0], [0, 0, 1, 0], [], []>, precision = #tpu.contract_precision<fp32>} : vector<16x32xf32>, vector<16x32xf32>, vector<16x16xf32> -> vector<16x16xf32>
    %6 = tpu.iota {dimensions = array<i32: 0>} : vector<16x16xi32>
    %7 = tpu.iota {dimensions = array<i32: 1>} : vector<16x16xi32>
    %8 = arith.cmpi eq, %6, %7 : vector<16x16xi32>
    %c8_i32 = arith.constant 8 : i32
    %9 = vector.broadcast %c8_i32 : i32 to vector<16x16xi32>
    %10 = arith.cmpi slt, %7, %9 : vector<16x16xi32>
    %cst_5 = arith.constant 0.000000e+00 : f32
    %11 = vector.broadcast %cst_5 : f32 to vector<16x16xf32>
    %12 = arith.select %8, %5, %11 : vector<16x16xi1>, vector<16x16xf32>
    %cst_6 = arith.constant dense<0.000000e+00> : vector<16xf32>
    %13 = vector.multi_reduction <add>, %12, %cst_6 [1] : vector<16x16xf32> to vector<16xf32>
    %14 = vector.shape_cast %13 : vector<16xf32> to vector<16x1xf32>
    %cst_7 = arith.constant dense<0.000000e+00> : vector<16xf32>
    %15 = vector.multi_reduction <add>, %12, %cst_7 [0] : vector<16x16xf32> to vector<16xf32>
    %16 = vector.shape_cast %15 : vector<16xf32> to vector<1x16xf32>
    %17 = vector.broadcast %14 : vector<16x1xf32> to vector<16x16xf32>
    %18 = vector.broadcast %16 : vector<1x16xf32> to vector<16x16xf32>
    %19 = arith.addf %17, %18 : vector<16x16xf32>
    %cst_8 = arith.constant 2.000000e+00 : f32
    %20 = vector.broadcast %cst_8 : f32 to vector<16x16xf32>
    %21 = arith.mulf %20, %5 : vector<16x16xf32>
    %22 = arith.subf %19, %21 : vector<16x16xf32>
    %cst_9 = arith.constant 0.000000e+00 : f32
    %23 = vector.broadcast %cst_9 : f32 to vector<16x16xf32>
    %24 = arith.maximumf %22, %23 : vector<16x16xf32>
    %cst_10 = arith.constant 0.000000e+00 : f32
    %25 = vector.broadcast %cst_10 : f32 to vector<16x16xf32>
    %26 = arith.select %8, %25, %24 : vector<16x16xi1>, vector<16x16xf32>
    %27 = tpu.iota {dimensions = array<i32: 0>} : vector<16x2xi32>
    %28 = tpu.iota {dimensions = array<i32: 1>} : vector<16x2xi32>
    %c4_i32 = arith.constant 4 : i32
    %29 = vector.broadcast %c4_i32 : i32 to vector<16x2xi32>
    %30 = arith.muli %28, %29 : vector<16x2xi32>
    %31 = arith.cmpi sge, %27, %30 : vector<16x2xi32>
    %c4_i32_11 = arith.constant 4 : i32
    %32 = vector.broadcast %c4_i32_11 : i32 to vector<16x2xi32>
    %33 = arith.addi %30, %32 : vector<16x2xi32>
    %34 = arith.cmpi slt, %27, %33 : vector<16x2xi32>
    %35 = arith.andi %31, %34 : vector<16x2xi1>
    %36 = arith.extui %35 : vector<16x2xi1> to vector<16x2xi32>
    %37 = arith.sitofp %36 : vector<16x2xi32> to vector<16x2xf32>
    %c8_i32_12 = arith.constant 8 : i32
    %38 = vector.broadcast %c8_i32_12 : i32 to vector<16x2xi32>
    %39 = arith.addi %30, %38 : vector<16x2xi32>
    %40 = arith.cmpi sge, %27, %39 : vector<16x2xi32>
    %c8_i32_13 = arith.constant 8 : i32
    %41 = vector.broadcast %c8_i32_13 : i32 to vector<16x2xi32>
    %42 = arith.addi %30, %41 : vector<16x2xi32>
    %c4_i32_14 = arith.constant 4 : i32
    %43 = vector.broadcast %c4_i32_14 : i32 to vector<16x2xi32>
    %44 = arith.addi %42, %43 : vector<16x2xi32>
    %45 = arith.cmpi slt, %27, %44 : vector<16x2xi32>
    %46 = arith.andi %40, %45 : vector<16x2xi1>
    %47 = arith.extui %46 : vector<16x2xi1> to vector<16x2xi32>
    %48 = arith.sitofp %47 : vector<16x2xi32> to vector<16x2xf32>
    %49 = arith.addf %37, %48 : vector<16x2xf32>
    %cst_15 = arith.constant dense<0.000000e+00> : vector<16x16xf32>
    %50 = tpu.matmul %49, %49, %cst_15 {dimension_numbers = #tpu.dot_dimension_numbers<[1], [1], [0], [0], [0, 0, 1, 0], [], []>} : vector<16x2xf32>, vector<16x2xf32>, vector<16x16xf32> -> vector<16x16xf32>
    %51 = arith.mulf %26, %50 : vector<16x16xf32>
    %cst_16 = arith.constant dense<0.000000e+00> : vector<16xf32>
    %52 = vector.multi_reduction <add>, %51, %cst_16 [1] : vector<16x16xf32> to vector<16xf32>
    %53 = vector.shape_cast %52 : vector<16xf32> to vector<16x1xf32>
    %54 = vector.broadcast %53 : vector<16x1xf32> to vector<16x2xf32>
    %55 = arith.mulf %49, %54 : vector<16x2xf32>
    %cst_17 = arith.constant dense<0.000000e+00> : vector<2xf32>
    %56 = vector.multi_reduction <add>, %55, %cst_17 [0] : vector<16x2xf32> to vector<2xf32>
    %57 = vector.shape_cast %56 : vector<2xf32> to vector<1x2xf32>
    %cst_18 = arith.constant 5.600000e+01 : f32
    %58 = vector.broadcast %cst_18 : f32 to vector<1x2xf32>
    %59 = arith.divf %57, %58 : vector<1x2xf32>
    %cst_19 = arith.constant 4.000000e+00 : f32
    %60 = vector.broadcast %cst_19 : f32 to vector<1x2xf32>
    %61 = arith.divf %59, %60 : vector<1x2xf32>
    %62 = vector.broadcast %61 : vector<1x2xf32> to vector<16x2xf32>
    %63 = arith.mulf %49, %62 : vector<16x2xf32>
    %cst_20 = arith.constant dense<0.000000e+00> : vector<16xf32>
    %64 = vector.multi_reduction <add>, %63, %cst_20 [1] : vector<16x2xf32> to vector<16xf32>
    %65 = vector.shape_cast %64 : vector<16xf32> to vector<16x1xf32>
    %cst_21 = arith.constant 1.000000e+00 : f32
    %66 = vector.broadcast %cst_21 : f32 to vector<16x1xf32>
    %67 = arith.mulf %65, %66 : vector<16x1xf32>
    %cst_22 = arith.constant 9.99999971E-10 : f32
    %68 = vector.broadcast %cst_22 : f32 to vector<16x1xf32>
    %69 = arith.addf %67, %68 : vector<16x1xf32>
    %cst_23 = arith.constant -1.000000e+00 : f32
    %70 = vector.broadcast %cst_23 : f32 to vector<16x1xf32>
    %71 = arith.divf %70, %69 : vector<16x1xf32>
    %72 = vector.broadcast %71 : vector<16x1xf32> to vector<16x16xf32>
    %73 = arith.mulf %26, %72 : vector<16x16xf32>
    %74 = math.exp %73 : vector<16x16xf32>
    %cst_24 = arith.constant 2.000000e+00 : f32
    %75 = vector.broadcast %cst_24 : f32 to vector<16x1xf32>
    %76 = arith.mulf %65, %75 : vector<16x1xf32>
    %cst_25 = arith.constant 9.99999971E-10 : f32
    %77 = vector.broadcast %cst_25 : f32 to vector<16x1xf32>
    %78 = arith.addf %76, %77 : vector<16x1xf32>
    %cst_26 = arith.constant -1.000000e+00 : f32
    %79 = vector.broadcast %cst_26 : f32 to vector<16x1xf32>
    %80 = arith.divf %79, %78 : vector<16x1xf32>
    %81 = vector.broadcast %80 : vector<16x1xf32> to vector<16x16xf32>
    %82 = arith.mulf %26, %81 : vector<16x16xf32>
    %83 = math.exp %82 : vector<16x16xf32>
    %84 = arith.addf %74, %83 : vector<16x16xf32>
    %cst_27 = arith.constant 4.000000e+00 : f32
    %85 = vector.broadcast %cst_27 : f32 to vector<16x1xf32>
    %86 = arith.mulf %65, %85 : vector<16x1xf32>
    %cst_28 = arith.constant 9.99999971E-10 : f32
    %87 = vector.broadcast %cst_28 : f32 to vector<16x1xf32>
    %88 = arith.addf %86, %87 : vector<16x1xf32>
    %cst_29 = arith.constant -1.000000e+00 : f32
    %89 = vector.broadcast %cst_29 : f32 to vector<16x1xf32>
    %90 = arith.divf %89, %88 : vector<16x1xf32>
    %91 = vector.broadcast %90 : vector<16x1xf32> to vector<16x16xf32>
    %92 = arith.mulf %26, %91 : vector<16x16xf32>
    %93 = math.exp %92 : vector<16x16xf32>
    %94 = arith.addf %84, %93 : vector<16x16xf32>
    %cst_30 = arith.constant 8.000000e+00 : f32
    %95 = vector.broadcast %cst_30 : f32 to vector<16x1xf32>
    %96 = arith.mulf %65, %95 : vector<16x1xf32>
    %cst_31 = arith.constant 9.99999971E-10 : f32
    %97 = vector.broadcast %cst_31 : f32 to vector<16x1xf32>
    %98 = arith.addf %96, %97 : vector<16x1xf32>
    %cst_32 = arith.constant -1.000000e+00 : f32
    %99 = vector.broadcast %cst_32 : f32 to vector<16x1xf32>
    %100 = arith.divf %99, %98 : vector<16x1xf32>
    %101 = vector.broadcast %100 : vector<16x1xf32> to vector<16x16xf32>
    %102 = arith.mulf %26, %101 : vector<16x16xf32>
    %103 = math.exp %102 : vector<16x16xf32>
    %104 = arith.addf %94, %103 : vector<16x16xf32>
    %cst_33 = arith.constant 1.600000e+01 : f32
    %105 = vector.broadcast %cst_33 : f32 to vector<16x1xf32>
    %106 = arith.mulf %65, %105 : vector<16x1xf32>
    %cst_34 = arith.constant 9.99999971E-10 : f32
    %107 = vector.broadcast %cst_34 : f32 to vector<16x1xf32>
    %108 = arith.addf %106, %107 : vector<16x1xf32>
    %cst_35 = arith.constant -1.000000e+00 : f32
    %109 = vector.broadcast %cst_35 : f32 to vector<16x1xf32>
    %110 = arith.divf %109, %108 : vector<16x1xf32>
    %111 = vector.broadcast %110 : vector<16x1xf32> to vector<16x16xf32>
    %112 = arith.mulf %26, %111 : vector<16x16xf32>
    %113 = math.exp %112 : vector<16x16xf32>
    %114 = arith.addf %104, %113 : vector<16x16xf32>
    %115 = arith.mulf %114, %50 : vector<16x16xf32>
    %cst_36 = arith.constant dense<0.000000e+00> : vector<16xf32>
    %116 = vector.multi_reduction <add>, %115, %cst_36 [1] : vector<16x16xf32> to vector<16xf32>
    %117 = vector.shape_cast %116 : vector<16xf32> to vector<16x1xf32>
    %cst_37 = arith.constant 0.000000e+00 : f32
    %118 = vector.broadcast %cst_37 : f32 to vector<16x16xf32>
    %119 = arith.select %10, %115, %118 : vector<16x16xi1>, vector<16x16xf32>
    %cst_38 = arith.constant dense<0.000000e+00> : vector<16xf32>
    %120 = vector.multi_reduction <add>, %119, %cst_38 [1] : vector<16x16xf32> to vector<16xf32>
    %121 = vector.shape_cast %120 : vector<16xf32> to vector<16x1xf32>
    %122 = arith.subf %117, %121 : vector<16x1xf32>
    %123 = vector.broadcast %121 : vector<16x1xf32> to vector<16x2xf32>
    %124 = arith.mulf %37, %123 : vector<16x2xf32>
    %cst_39 = arith.constant dense<0.000000e+00> : vector<2xf32>
    %125 = vector.multi_reduction <add>, %124, %cst_39 [0] : vector<16x2xf32> to vector<2xf32>
    %126 = vector.shape_cast %125 : vector<2xf32> to vector<1x2xf32>
    %127 = vector.broadcast %122 : vector<16x1xf32> to vector<16x2xf32>
    %128 = arith.mulf %37, %127 : vector<16x2xf32>
    %cst_40 = arith.constant dense<0.000000e+00> : vector<2xf32>
    %129 = vector.multi_reduction <add>, %128, %cst_40 [0] : vector<16x2xf32> to vector<2xf32>
    %130 = vector.shape_cast %129 : vector<2xf32> to vector<1x2xf32>
    %131 = vector.broadcast %121 : vector<16x1xf32> to vector<16x2xf32>
    %132 = arith.mulf %48, %131 : vector<16x2xf32>
    %cst_41 = arith.constant dense<0.000000e+00> : vector<2xf32>
    %133 = vector.multi_reduction <add>, %132, %cst_41 [0] : vector<16x2xf32> to vector<2xf32>
    %134 = vector.shape_cast %133 : vector<2xf32> to vector<1x2xf32>
    %135 = vector.broadcast %122 : vector<16x1xf32> to vector<16x2xf32>
    %136 = arith.mulf %48, %135 : vector<16x2xf32>
    %cst_42 = arith.constant dense<0.000000e+00> : vector<2xf32>
    %137 = vector.multi_reduction <add>, %136, %cst_42 [0] : vector<16x2xf32> to vector<2xf32>
    %138 = vector.shape_cast %137 : vector<2xf32> to vector<1x2xf32>
    %cst_43 = arith.constant 6.250000e-02 : f32
    %139 = vector.broadcast %cst_43 : f32 to vector<1x2xf32>
    %140 = arith.mulf %126, %139 : vector<1x2xf32>
    %cst_44 = arith.constant 6.250000e-02 : f32
    %141 = vector.broadcast %cst_44 : f32 to vector<1x2xf32>
    %142 = arith.mulf %138, %141 : vector<1x2xf32>
    %cst_45 = arith.constant 6.250000e-02 : f32
    %143 = vector.broadcast %cst_45 : f32 to vector<1x2xf32>
    %144 = arith.mulf %130, %143 : vector<1x2xf32>
    %cst_46 = arith.constant 6.250000e-02 : f32
    %145 = vector.broadcast %cst_46 : f32 to vector<1x2xf32>
    %146 = arith.mulf %134, %145 : vector<1x2xf32>
    %147 = arith.addf %140, %142 : vector<1x2xf32>
    %148 = arith.subf %147, %144 : vector<1x2xf32>
    %149 = arith.subf %148, %146 : vector<1x2xf32>
    %cst_47 = arith.constant dense<0xFF800000> : vector<16xf32>
    %150 = vector.multi_reduction <maximumf>, %51, %cst_47 [1] : vector<16x16xf32> to vector<16xf32>
    %151 = vector.shape_cast %150 : vector<16xf32> to vector<16x1xf32>
    %152 = vector.broadcast %151 : vector<16x1xf32> to vector<16x2xf32>
    %153 = arith.mulf %49, %152 : vector<16x2xf32>
    %cst_48 = arith.constant dense<0xFF800000> : vector<2xf32>
    %154 = vector.multi_reduction <maximumf>, %153, %cst_48 [0] : vector<16x2xf32> to vector<2xf32>
    %155 = vector.shape_cast %154 : vector<2xf32> to vector<1x2xf32>
    %156 = tpu.concatenate %149, %140, %142, %144, %146, %155 in 0 : vector<1x2xf32>, vector<1x2xf32>, vector<1x2xf32>, vector<1x2xf32>, vector<1x2xf32>, vector<1x2xf32> -> vector<6x2xf32>
    %c0_49 = arith.constant 0 : index
    %c0_50 = arith.constant 0 : index
    %c0_51 = arith.constant 0 : index
    %157 = vector.load %arg3[%c0_49, %c0_50, %c0_51] : memref<1x6x2xf32, #tpu.memory_space<vmem>>, vector<1x6x2xf32>
    %158 = vector.shape_cast %157 : vector<1x6x2xf32> to vector<6x2xf32>
    %159 = vector.shape_cast %156 : vector<6x2xf32> to vector<1x6x2xf32>
    tpu.vector_store %arg3[%c0_49, %c0_50, %c0_51], %159 {strides = array<i32>} : memref<1x6x2xf32, #tpu.memory_space<vmem>>, vector<1x6x2xf32>,
    return
  }
  func.func @transform_0(%arg0: i32) -> (i32, i32, i32) {
    %c0_i32 = arith.constant 0 : i32
    %c0_i32_0 = arith.constant 0 : i32
    %c0_i32_1 = arith.constant 0 : i32
    return %arg0, %c0_i32, %c0_i32_0 : i32, i32, i32
  }
  func.func @transform_1(%arg0: i32) -> (i32, i32, i32) {
    %c0_i32 = arith.constant 0 : i32
    %c0_i32_0 = arith.constant 0 : i32
    %c0_i32_1 = arith.constant 0 : i32
    return %arg0, %c0_i32, %c0_i32_0 : i32, i32, i32
  }
  func.func @transform_2(%arg0: i32) -> (i32, i32, i32) {
    %c0_i32 = arith.constant 0 : i32
    %c0_i32_0 = arith.constant 0 : i32
    %c0_i32_1 = arith.constant 0 : i32
    return %arg0, %c0_i32, %c0_i32_0 : i32, i32, i32
  }
}

</mosaic_0001>

<llo_original>
// kernel: tpu_custom_call.1
$region0: #{tpu_custom_call.1}
  #allocation0 [shape = 'u32[]', space=smem, size = 0x4, offset = 0x4, fixed_abs, tag = 'smem constant byte address 0x4 - core index']
  #allocation1 [shape = 'u32[144,128]{1,0:T(1,128)}', space=vmem, size = 0x12000, scoped, tag = 'internal scratch']
  %s0 = inlined_call_operand.hbm [shape: f32[2,8,32], index: 0, kind: input, shape index: {}]
  %s1 = inlined_call_operand.hbm [shape: f32[2,8,32], index: 1, kind: input, shape index: {}]
  %s2 = inlined_call_operand.vmem [shape: f32[2,6,2], index: 2, kind: output, shape index: {}]
  %s3 = sld [smem:[#allocation0]]
  $region49: #{tpu_custom_call.1} parent=0
    _
  %s5 = ssub.s32 1, %s3
  %s6 = scalar_select 0, %s5, %s3
  $region1: #{tpu_custom_call.1} parent=0
    #allocation2 [shape = 'u8[8192]{0}', space=vmem, size = 0x2000, scoped, tag = 'input window, operand 0']
    #allocation3 [shape = 's32[2]{0}', space=sflag, size = 0x8, scoped, tag = 'scoped memory for tpu_custom_call.1']
    #allocation4 [shape = 'u8[8192]{0}', space=vmem, size = 0x2000, scoped, tag = 'input window, operand 1']
    #allocation5 [shape = 's32[2]{0}', space=sflag, size = 0x8, scoped, tag = 'scoped memory for tpu_custom_call.1']
    %7 = vsyncpa [#allocation3], 0
    %s8 = scalar_lea.sflag [#allocation3], 1
    %9 = vsyncpa %s8, 0
    %10 = vsyncpa [#allocation5], 0
    %s11 = scalar_lea.sflag [#allocation5], 1
    %12 = vsyncpa %s11, 0
    loop: start=0, step=1, limit=4
    $region2: #{tpu_custom_call.1} parent=1 // loop_pre_header
      _
    $region3: #{tpu_custom_call.1} parent=1 // loop_header
      %s14 = sphi 0, %s18
      %p15 = scmp.ge.s32.totalorder %s14, 4
      %s24 = sphi 0, %s26
      %s27 = sphi 0, %s24
      %s28 = sphi 0, %s27
      %s44 = sphi 0, %s28
      %s50 = sphi 0, %s52
      %s53 = sphi 0, %s50
      %s54 = sphi 0, %s53
      %s70 = sphi 0, %s54
      %s76 = sphi 0, %s78
      %s79 = sphi 0, %s76
      %s80 = sphi 0, %s79
      %s96 = sphi 0, %s80
    $region4: #{tpu_custom_call.1} parent=1 // loop_header_branch
      %17 = sbr.rel (%p15) target = $region8
    $region5: #{tpu_custom_call.1} parent=1 // loop_body
      %s19 = ssub.s32 %s14, 1
      %s20 = ssub.s32 %s14, 2
      %s21 = sadd.s32 %s14, 1
      %s22 = ssub.s32 %s14, %s21
      %p23 = scmp.eq.s32.totalorder %s22, 0
      %s25 = sadd.s32 %s24, 1
      %s26 = scalar_select %p23, %s24, %s25
      %p29 = pneg %p23
      %p30 = scmp.eq.s32.totalorder %s14, 1
      %p31 = por %p29, %p30
      %p32 = scmp.ne.s32.totalorder %s24, %s27
      %p33 = scmp.eq.s32.totalorder %s14, 0
      %p34 = por %p32, %p33
      %p35 = scmp.ne.s32.totalorder %s24, %s27
      %p36 = scmp.eq.s32.totalorder %s19, 1
      %p37 = por %p35, %p36
      %p38 = scmp.ne.s32.totalorder %s27, %s28
      %p39 = scmp.eq.s32.totalorder %s19, 0
      %p40 = por %p38, %p39
      %p41 = scmp.ne.s32.totalorder %s27, %s28
      %p42 = scmp.eq.s32.totalorder %s20, 1
      %p43 = por %p41, %p42
      %p45 = scmp.ne.s32.totalorder %s28, %s44
      %p46 = scmp.eq.s32.totalorder %s20, 0
      %p47 = por %p45, %p46
      %s48 = ssub.s32 %s14, %s21
      %p49 = scmp.eq.s32.totalorder %s48, 0
      %s51 = sadd.s32 %s50, 1
      %s52 = scalar_select %p49, %s50, %s51
      %p55 = pneg %p49
      %p56 = scmp.eq.s32.totalorder %s14, 1
      %p57 = por %p55, %p56
      %p58 = scmp.ne.s32.totalorder %s50, %s53
      %p59 = scmp.eq.s32.totalorder %s14, 0
      %p60 = por %p58, %p59
      %p61 = scmp.ne.s32.totalorder %s50, %s53
      %p62 = scmp.eq.s32.totalorder %s19, 1
      %p63 = por %p61, %p62
      %p64 = scmp.ne.s32.totalorder %s53, %s54
      %p65 = scmp.eq.s32.totalorder %s19, 0
      %p66 = por %p64, %p65
      %p67 = scmp.ne.s32.totalorder %s53, %s54
      %p68 = scmp.eq.s32.totalorder %s20, 1
      %p69 = por %p67, %p68
      %p71 = scmp.ne.s32.totalorder %s54, %s70
      %p72 = scmp.eq.s32.totalorder %s20, 0
      %p73 = por %p71, %p72
      %s74 = ssub.s32 %s14, %s21
      %p75 = scmp.eq.s32.totalorder %s74, 0
      %s77 = sadd.s32 %s76, 1
      %s78 = scalar_select %p75, %s76, %s77
      %p81 = pneg %p75
      %p82 = scmp.eq.s32.totalorder %s14, 1
      %p83 = por %p81, %p82
      %p84 = scmp.ne.s32.totalorder %s76, %s79
      %p85 = scmp.eq.s32.totalorder %s14, 0
      %p86 = por %p84, %p85
      %p87 = scmp.ne.s32.totalorder %s76, %s79
      %p88 = scmp.eq.s32.totalorder %s19, 1
      %p89 = por %p87, %p88
      %p90 = scmp.ne.s32.totalorder %s79, %s80
      %p91 = scmp.eq.s32.totalorder %s19, 0
      %p92 = por %p90, %p91
      %p93 = scmp.ne.s32.totalorder %s79, %s80
      %p94 = scmp.eq.s32.totalorder %s20, 1
      %p95 = por %p93, %p94
      %p97 = scmp.ne.s32.totalorder %s80, %s96
      %p98 = scmp.eq.s32.totalorder %s20, 0
      %p99 = por %p97, %p98
      %p100 = scmp.le.s32.totalorder 1, %s14
      %p101 = scmp.lt.s32.totalorder %s14, 3
      %p102 = pnand %p100, %p101
      %p103 = pneg %p102
      // Predicated region
      $region9: #{tpu_custom_call.1} parent=5 // pred_check
        _
      $region10: #{tpu_custom_call.1} parent=5 // pred_check_branch
        %105 = sbr.rel (%p102) target = $region12
      $region11: #{tpu_custom_call.1} parent=5 // pred_region
        %s106 = ssub.s32 %s14, 1
      $region12: #{tpu_custom_call.1} parent=5 // pred_fallthru
        _
      %p107 = scmp.lt.s32.totalorder %s14, 2
      // Predicated region
      $region13: #{tpu_custom_call.1} parent=5 // pred_check
        %p108 = pneg %p107
      $region14: #{tpu_custom_call.1} parent=5 // pred_check_branch
        %110 = sbr.rel (%p108) target = $region16
      $region15: #{tpu_custom_call.1} parent=5 // pred_region
        // Predicated region
        $region17: #{tpu_custom_call.1} parent=15 // pred_check
          %p111 = pneg %p34
        $region18: #{tpu_custom_call.1} parent=15 // pred_check_branch
          %113 = sbr.rel (%p111) target = $region20
        $region19: #{tpu_custom_call.1} parent=15 // pred_region
          %s114 = sand.u32 %s24, 1
          %s115 = scalar_lea.sflag [#allocation3], %s114
          %s116 = sand.u32 %s24, 1
          %s117 = smul.addr %s116, 8
          %s118 = scalar_lea.vmem [#allocation2], %s117
          %s120 = ssub.s32 128, 128
          %121 = vsyncadd %s115, %s120
          %s122 = smul.addr %s14, 128
          %s123 = scalar_lea.hbm %s0, %s122
          %s125 = sshll.u32 %s118, 4
          %s126 = int_to_ptr.vmem [resolvable:$true] %s125
          %128 = dma.hbm_to_vmem [thread:$0]  %s123, 128, %s126, %s115
        $region20: #{tpu_custom_call.1} parent=15 // pred_fallthru
          _
        // Predicated region
        $region21: #{tpu_custom_call.1} parent=15 // pred_check
          %p129 = pneg %p60
        $region22: #{tpu_custom_call.1} parent=15 // pred_check_branch
          %131 = sbr.rel (%p129) target = $region24
        $region23: #{tpu_custom_call.1} parent=15 // pred_region
          %s132 = sand.u32 %s50, 1
          %s133 = scalar_lea.sflag [#allocation5], %s132
          %s134 = sand.u32 %s50, 1
          %s135 = smul.addr %s134, 8
          %s136 = scalar_lea.vmem [#allocation4], %s135
          %s138 = ssub.s32 128, 128
          %139 = vsyncadd %s133, %s138
          %s140 = smul.addr %s14, 128
          %s141 = scalar_lea.hbm %s1, %s140
          %s143 = sshll.u32 %s136, 4
          %s144 = int_to_ptr.vmem [resolvable:$true] %s143
          %146 = dma.hbm_to_vmem [thread:$0]  %s141, 128, %s144, %s133
        $region24: #{tpu_custom_call.1} parent=15 // pred_fallthru
          _
      $region16: #{tpu_custom_call.1} parent=5 // pred_fallthru
        _
      %p147 = scmp.le.s32.totalorder 1, %s14
      %p148 = scmp.lt.s32.totalorder %s14, 3
      %p149 = pnand %p147, %p148
      %p150 = pneg %p149
      // Predicated region
      $region25: #{tpu_custom_call.1} parent=5 // pred_check
        _
      $region26: #{tpu_custom_call.1} parent=5 // pred_check_branch
        %152 = sbr.rel (%p149) target = $region28
      $region27: #{tpu_custom_call.1} parent=5 // pred_region
        %s153 = ssub.s32 %s14, 1
        %s154 = sand.u32 %s27, 1
        %s155 = scalar_lea.sflag [#allocation3], %s154
        %s156 = sand.u32 %s27, 1
        %s157 = smul.addr %s156, 8
        %s158 = scalar_lea.vmem [#allocation2], %s157
        // Predicated region
        $region29: #{tpu_custom_call.1} parent=27 // pred_check
          %p159 = pneg %p40
        $region30: #{tpu_custom_call.1} parent=27 // pred_check_branch
          %161 = sbr.rel (%p159) target = $region32
        $region31: #{tpu_custom_call.1} parent=27 // pred_region
          %162 = dma.done %s155, 128
        $region32: #{tpu_custom_call.1} parent=27 // pred_fallthru
          _
        %s163 = sand.u32 %s53, 1
        %s164 = scalar_lea.sflag [#allocation5], %s163
        %s165 = sand.u32 %s53, 1
        %s166 = smul.addr %s165, 8
        %s167 = scalar_lea.vmem [#allocation4], %s166
        // Predicated region
        $region33: #{tpu_custom_call.1} parent=27 // pred_check
          %p168 = pneg %p66
        $region34: #{tpu_custom_call.1} parent=27 // pred_check_branch
          %170 = sbr.rel (%p168) target = $region36
        $region35: #{tpu_custom_call.1} parent=27 // pred_region
          %171 = dma.done %s164, 128
        $region36: #{tpu_custom_call.1} parent=27 // pred_fallthru
          _
        %s172 = sand.u32 %s27, 1
        %s173 = scalar_lea.sflag [#allocation3], %s172
        %s174 = sand.u32 %s27, 1
        %s175 = smul.addr %s174, 8
        %s176 = scalar_lea.vmem [#allocation2], %s175
        %p177 = pneg %p40
        %p178 = pneg %p37
        %s179 = sand.u32 %s53, 1
        %s180 = scalar_lea.sflag [#allocation5], %s179
        %s181 = sand.u32 %s53, 1
        %s182 = smul.addr %s181, 8
        %s183 = scalar_lea.vmem [#allocation4], %s182
        %p184 = pneg %p66
        %p185 = pneg %p63
        %p186 = pneg %p92
        %p187 = pneg %p89
        %p188 = scmp.lt.s32.totalorder %s19, 1
        %s189 = scalar_select %p188, %s19, 1
        %s190 = smul.addr %s189, 8
        %s191 = scalar_lea.vmem %s2, %s190
        %p192 = scmp.lt.s32.totalorder %s19, 1
        %s193 = scalar_select %p192, %s19, 1
        %s194 = smul.addr %s193, 8
        %s195 = scalar_lea.vmem %s2, %s194
        %v196 = vld [vmem:[%s158] sm:$0xff]
        %v197 = vld [vmem:[%s167] sm:$0xff]
        %vm198 = vcmask 261120
        %v200 = vsel %vm198, %v196, 0
        %v203 = vsel %vm198, %v197, 0
        %205 = vmatprep.subr.mxu0 0.0
        %206 = vmatpush1.xpose.msra.mxu0 0.0
        %207 = vmatprep.subr.mxu0 0.0
        %208 = vmatpush1.xpose.msra.mxu0 0.0
        %209 = vmatprep.subr.mxu0 0.0
        %210 = vmatpush1.xpose.msra.mxu0 0.0
        %211 = vmatprep.subr.mxu0 0.0
        %212 = vmatpush1.xpose.msra.mxu0 0.0
        %213 = vmatprep.subr.mxu0 0.0
        %214 = vmatpush1.xpose.msra.mxu0 0.0
        %215 = vmatprep.subr.mxu0 0.0
        %216 = vmatpush1.xpose.msra.mxu0 0.0
        %217 = vmatprep.subr.mxu0 0.0
        %218 = vmatpush1.xpose.msra.mxu0 0.0
        %219 = vmatprep.subr.mxu0 0.0
        %220 = vmatpush1.xpose.msra.mxu0 0.0
        %221 = vmatprep.subr.mxu0 0.0
        %222 = vmatpush1.xpose.msra.mxu0 0.0
        %223 = vmatprep.subr.mxu0 0.0
        %224 = vmatpush1.xpose.msra.mxu0 0.0
        %225 = vmatprep.subr.mxu0 0.0
        %226 = vmatpush1.xpose.msra.mxu0 0.0
        %227 = vmatprep.subr.mxu0 0.0
        %228 = vmatpush1.xpose.msra.mxu0 0.0
        %229 = vmatprep.subr.mxu0 0.0
        %230 = vmatpush1.xpose.msra.mxu0 0.0
        %231 = vmatprep.subr.mxu0 0.0
        %232 = vmatpush1.xpose.msra.mxu0 0.0
        %233 = vmatprep.subr.mxu0 0.0
        %v234 = vand.u32 %v203, 4294901760
        %235 = vmatpush1.xpose.msra.mxu0 %v234
        %236 = vmatprep.subr.mxu0 0.0
        %v237 = vand.u32 %v200, 4294901760
        %238 = vmatpush1.xpose.msra.mxu0 %v237
        %239 = vmatprep.subr.mxu0 0.0
        %240 = vmatpush2.xpose.msra.mxu0 0.0
        %241 = vmatprep.subr.mxu0 0.0
        %242 = vmatpush2.xpose.msra.mxu0 0.0
        %243 = vmatprep.subr.mxu0 0.0
        %244 = vmatpush2.xpose.msra.mxu0 0.0
        %245 = vmatprep.subr.mxu0 0.0
        %246 = vmatpush2.xpose.msra.mxu0 0.0
        %247 = vmatprep.subr.mxu0 0.0
        %248 = vmatpush2.xpose.msra.mxu0 0.0
        %249 = vmatprep.subr.mxu0 0.0
        %250 = vmatpush2.xpose.msra.mxu0 0.0
        %251 = vmatprep.subr.mxu0 0.0
        %252 = vmatpush2.xpose.msra.mxu0 0.0
        %253 = vmatprep.subr.mxu0 0.0
        %254 = vmatpush2.xpose.msra.mxu0 0.0
        %255 = vmatprep.subr.mxu0 0.0
        %256 = vmatpush2.xpose.msra.mxu0 0.0
        %257 = vmatprep.subr.mxu0 0.0
        %258 = vmatpush2.xpose.msra.mxu0 0.0
        %259 = vmatprep.subr.mxu0 0.0
        %260 = vmatpush2.xpose.msra.mxu0 0.0
        %261 = vmatprep.subr.mxu0 0.0
        %262 = vmatpush2.xpose.msra.mxu0 0.0
        %263 = vmatprep.subr.mxu0 0.0
        %264 = vmatpush2.xpose.msra.mxu0 0.0
        %265 = vmatprep.subr.mxu0 0.0
        %266 = vmatpush2.xpose.msra.mxu0 0.0
        %267 = vmatprep.subr.mxu0 0.0
        %268 = vmatpush2.xpose.msra.mxu0 0.0
        %269 = vmatprep.subr.mxu0 0.0
        %270 = vmatpush2.xpose.msra.mxu0 0.0
        %271 = vmatprep.mubr.f32.mxu0 0.0
        %v272 = vand.u32 %v200, 4294901760
        %v273 = vsub.f32 %v200, %v272
        %v274 = vand.u32 %v273, 4294901760
        %v275 = vsub.f32 %v273, %v274
        %v276 = vand.u32 %v275, 4294901760
        %277 = vmatmul.mubr.f32.gmra.mxu0 %v276
        %v278 = vpop.f32.mrf.mxu0
        %v279 = vadd.f32 0.0, %v278
        %v280 = vpop.f32.mrf.mxu0
        %281 = vmatprep.mubr.f32.mxu0 0.0
        %v282 = vand.u32 %v203, 4294901760
        %v283 = vsub.f32 %v203, %v282
        %v284 = vand.u32 %v283, 4294901760
        %v285 = vsub.f32 %v283, %v284
        %v286 = vand.u32 %v285, 4294901760
        %287 = vmatmul.mubr.f32.gmra.mxu0 %v286
        %v288 = vpop.f32.mrf.mxu0
        %v289 = vadd.f32 0.0, %v288
        %v290 = vpop.f32.mrf.mxu0
        %291 = vdwg.mxu0
        %292 = vmatprep.subr.mxu0 0.0
        %293 = vmatpush1.xpose.msra.mxu0 0.0
        %294 = vmatprep.subr.mxu0 0.0
        %295 = vmatpush1.xpose.msra.mxu0 0.0
        %296 = vmatprep.subr.mxu0 0.0
        %297 = vmatpush1.xpose.msra.mxu0 0.0
        %298 = vmatprep.subr.mxu0 0.0
        %299 = vmatpush1.xpose.msra.mxu0 0.0
        %300 = vmatprep.subr.mxu0 0.0
        %301 = vmatpush1.xpose.msra.mxu0 0.0
        %302 = vmatprep.subr.mxu0 0.0
        %303 = vmatpush1.xpose.msra.mxu0 0.0
        %304 = vmatprep.subr.mxu0 0.0
        %305 = vmatpush1.xpose.msra.mxu0 0.0
        %306 = vmatprep.subr.mxu0 0.0
        %307 = vmatpush1.xpose.msra.mxu0 0.0
        %308 = vmatprep.subr.mxu0 0.0
        %309 = vmatpush1.xpose.msra.mxu0 0.0
        %310 = vmatprep.subr.mxu0 0.0
        %311 = vmatpush1.xpose.msra.mxu0 0.0
        %312 = vmatprep.subr.mxu0 0.0
        %313 = vmatpush1.xpose.msra.mxu0 0.0
        %314 = vmatprep.subr.mxu0 0.0
        %315 = vmatpush1.xpose.msra.mxu0 0.0
        %316 = vmatprep.subr.mxu0 0.0
        %317 = vmatpush1.xpose.msra.mxu0 0.0
        %318 = vmatprep.subr.mxu0 0.0
        %319 = vmatpush1.xpose.msra.mxu0 0.0
        %320 = vmatprep.subr.mxu0 0.0
        %v321 = vand.u32 %v203, 4294901760
        %v322 = vsub.f32 %v203, %v321
        %v323 = vand.u32 %v322, 4294901760
        %v324 = vsub.f32 %v322, %v323
        %v325 = vand.u32 %v324, 4294901760
        %326 = vmatpush1.xpose.msra.mxu0 %v325
        %327 = vmatprep.subr.mxu0 0.0
        %v328 = vand.u32 %v200, 4294901760
        %v329 = vsub.f32 %v200, %v328
        %v330 = vand.u32 %v329, 4294901760
        %v331 = vsub.f32 %v329, %v330
        %v332 = vand.u32 %v331, 4294901760
        %333 = vmatpush1.xpose.msra.mxu0 %v332
        %334 = vmatprep.subr.mxu0 0.0
        %335 = vmatpush2.xpose.msra.mxu0 0.0
        %336 = vmatprep.subr.mxu0 0.0
        %337 = vmatpush2.xpose.msra.mxu0 0.0
        %338 = vmatprep.subr.mxu0 0.0
        %339 = vmatpush2.xpose.msra.mxu0 0.0
        %340 = vmatprep.subr.mxu0 0.0
        %341 = vmatpush2.xpose.msra.mxu0 0.0
        %342 = vmatprep.subr.mxu0 0.0
        %343 = vmatpush2.xpose.msra.mxu0 0.0
        %344 = vmatprep.subr.mxu0 0.0
        %345 = vmatpush2.xpose.msra.mxu0 0.0
        %346 = vmatprep.subr.mxu0 0.0
        %347 = vmatpush2.xpose.msra.mxu0 0.0
        %348 = vmatprep.subr.mxu0 0.0
        %349 = vmatpush2.xpose.msra.mxu0 0.0
        %350 = vmatprep.subr.mxu0 0.0
        %351 = vmatpush2.xpose.msra.mxu0 0.0
        %352 = vmatprep.subr.mxu0 0.0
        %353 = vmatpush2.xpose.msra.mxu0 0.0
        %354 = vmatprep.subr.mxu0 0.0
        %355 = vmatpush2.xpose.msra.mxu0 0.0
        %356 = vmatprep.subr.mxu0 0.0
        %357 = vmatpush2.xpose.msra.mxu0 0.0
        %358 = vmatprep.subr.mxu0 0.0
        %359 = vmatpush2.xpose.msra.mxu0 0.0
        %360 = vmatprep.subr.mxu0 0.0
        %361 = vmatpush2.xpose.msra.mxu0 0.0
        %362 = vmatprep.subr.mxu0 0.0
        %363 = vmatpush2.xpose.msra.mxu0 0.0
        %364 = vmatprep.subr.mxu0 0.0
        %365 = vmatpush2.xpose.msra.mxu0 0.0
        %366 = vmatprep.mubr.f32.mxu0 0.0
        %v367 = vand.u32 %v200, 4294901760
        %368 = vmatmul.mubr.f32.gmra.mxu0 %v367
        %v369 = vpop.f32.mrf.mxu0
        %v370 = vadd.f32 %v279, %v369
        %v371 = vpop.f32.mrf.mxu0
        %372 = vmatprep.mubr.f32.mxu0 0.0
        %v373 = vand.u32 %v203, 4294901760
        %374 = vmatmul.mubr.f32.gmra.mxu0 %v373
        %v375 = vpop.f32.mrf.mxu0
        %v376 = vadd.f32 %v289, %v375
        %v377 = vpop.f32.mrf.mxu0
        %378 = vdwg.mxu0
        %379 = vmatprep.subr.mxu0 0.0
        %380 = vmatpush1.xpose.msra.mxu0 0.0
        %381 = vmatprep.subr.mxu0 0.0
        %382 = vmatpush1.xpose.msra.mxu0 0.0
        %383 = vmatprep.subr.mxu0 0.0
        %384 = vmatpush1.xpose.msra.mxu0 0.0
        %385 = vmatprep.subr.mxu0 0.0
        %386 = vmatpush1.xpose.msra.mxu0 0.0
        %387 = vmatprep.subr.mxu0 0.0
        %388 = vmatpush1.xpose.msra.mxu0 0.0
        %389 = vmatprep.subr.mxu0 0.0
        %390 = vmatpush1.xpose.msra.mxu0 0.0
        %391 = vmatprep.subr.mxu0 0.0
        %392 = vmatpush1.xpose.msra.mxu0 0.0
        %393 = vmatprep.subr.mxu0 0.0
        %394 = vmatpush1.xpose.msra.mxu0 0.0
        %395 = vmatprep.subr.mxu0 0.0
        %396 = vmatpush1.xpose.msra.mxu0 0.0
        %397 = vmatprep.subr.mxu0 0.0
        %398 = vmatpush1.xpose.msra.mxu0 0.0
        %399 = vmatprep.subr.mxu0 0.0
        %400 = vmatpush1.xpose.msra.mxu0 0.0
        %401 = vmatprep.subr.mxu0 0.0
        %402 = vmatpush1.xpose.msra.mxu0 0.0
        %403 = vmatprep.subr.mxu0 0.0
        %404 = vmatpush1.xpose.msra.mxu0 0.0
        %405 = vmatprep.subr.mxu0 0.0
        %406 = vmatpush1.xpose.msra.mxu0 0.0
        %407 = vmatprep.subr.mxu0 0.0
        %v408 = vand.u32 %v203, 4294901760
        %v409 = vsub.f32 %v203, %v408
        %410 = vmatpush1.xpose.msra.mxu0 %v409
        %411 = vmatprep.subr.mxu0 0.0
        %v412 = vand.u32 %v200, 4294901760
        %v413 = vsub.f32 %v200, %v412
        %414 = vmatpush1.xpose.msra.mxu0 %v413
        %415 = vmatprep.subr.mxu0 0.0
        %416 = vmatpush2.xpose.msra.mxu0 0.0
        %417 = vmatprep.subr.mxu0 0.0
        %418 = vmatpush2.xpose.msra.mxu0 0.0
        %419 = vmatprep.subr.mxu0 0.0
        %420 = vmatpush2.xpose.msra.mxu0 0.0
        %421 = vmatprep.subr.mxu0 0.0
        %422 = vmatpush2.xpose.msra.mxu0 0.0
        %423 = vmatprep.subr.mxu0 0.0
        %424 = vmatpush2.xpose.msra.mxu0 0.0
        %425 = vmatprep.subr.mxu0 0.0
        %426 = vmatpush2.xpose.msra.mxu0 0.0
        %427 = vmatprep.subr.mxu0 0.0
        %428 = vmatpush2.xpose.msra.mxu0 0.0
        %429 = vmatprep.subr.mxu0 0.0
        %430 = vmatpush2.xpose.msra.mxu0 0.0
        %431 = vmatprep.subr.mxu0 0.0
        %432 = vmatpush2.xpose.msra.mxu0 0.0
        %433 = vmatprep.subr.mxu0 0.0
        %434 = vmatpush2.xpose.msra.mxu0 0.0
        %435 = vmatprep.subr.mxu0 0.0
        %436 = vmatpush2.xpose.msra.mxu0 0.0
        %437 = vmatprep.subr.mxu0 0.0
        %438 = vmatpush2.xpose.msra.mxu0 0.0
        %439 = vmatprep.subr.mxu0 0.0
        %440 = vmatpush2.xpose.msra.mxu0 0.0
        %441 = vmatprep.subr.mxu0 0.0
        %442 = vmatpush2.xpose.msra.mxu0 0.0
        %443 = vmatprep.subr.mxu0 0.0
        %444 = vmatpush2.xpose.msra.mxu0 0.0
        %445 = vmatprep.subr.mxu0 0.0
        %446 = vmatpush2.xpose.msra.mxu0 0.0
        %447 = vmatprep.mubr.f32.mxu0 0.0
        %v448 = vand.u32 %v200, 4294901760
        %v449 = vsub.f32 %v200, %v448
        %450 = vmatmul.mubr.f32.gmra.mxu0 %v449
        %v451 = vpop.f32.mrf.mxu0
        %v452 = vadd.f32 %v370, %v451
        %v453 = vpop.f32.mrf.mxu0
        %454 = vmatprep.mubr.f32.mxu0 0.0
        %v455 = vand.u32 %v203, 4294901760
        %v456 = vsub.f32 %v203, %v455
        %457 = vmatmul.mubr.f32.gmra.mxu0 %v456
        %v458 = vpop.f32.mrf.mxu0
        %v459 = vadd.f32 %v376, %v458
        %v460 = vpop.f32.mrf.mxu0
        %461 = vdwg.mxu0
        %462 = vmatprep.subr.mxu0 0.0
        %463 = vmatpush1.xpose.msra.mxu0 0.0
        %464 = vmatprep.subr.mxu0 0.0
        %465 = vmatpush1.xpose.msra.mxu0 0.0
        %466 = vmatprep.subr.mxu0 0.0
        %467 = vmatpush1.xpose.msra.mxu0 0.0
        %468 = vmatprep.subr.mxu0 0.0
        %469 = vmatpush1.xpose.msra.mxu0 0.0
        %470 = vmatprep.subr.mxu0 0.0
        %471 = vmatpush1.xpose.msra.mxu0 0.0
        %472 = vmatprep.subr.mxu0 0.0
        %473 = vmatpush1.xpose.msra.mxu0 0.0
        %474 = vmatprep.subr.mxu0 0.0
        %475 = vmatpush1.xpose.msra.mxu0 0.0
        %476 = vmatprep.subr.mxu0 0.0
        %477 = vmatpush1.xpose.msra.mxu0 0.0
        %478 = vmatprep.subr.mxu0 0.0
        %479 = vmatpush1.xpose.msra.mxu0 0.0
        %480 = vmatprep.subr.mxu0 0.0
        %481 = vmatpush1.xpose.msra.mxu0 0.0
        %482 = vmatprep.subr.mxu0 0.0
        %483 = vmatpush1.xpose.msra.mxu0 0.0
        %484 = vmatprep.subr.mxu0 0.0
        %485 = vmatpush1.xpose.msra.mxu0 0.0
        %486 = vmatprep.subr.mxu0 0.0
        %487 = vmatpush1.xpose.msra.mxu0 0.0
        %488 = vmatprep.subr.mxu0 0.0
        %489 = vmatpush1.xpose.msra.mxu0 0.0
        %490 = vmatprep.subr.mxu0 0.0
        %v491 = vand.u32 %v203, 4294901760
        %492 = vmatpush1.xpose.msra.mxu0 %v491
        %493 = vmatprep.subr.mxu0 0.0
        %v494 = vand.u32 %v200, 4294901760
        %495 = vmatpush1.xpose.msra.mxu0 %v494
        %496 = vmatprep.subr.mxu0 0.0
        %497 = vmatpush2.xpose.msra.mxu0 0.0
        %498 = vmatprep.subr.mxu0 0.0
        %499 = vmatpush2.xpose.msra.mxu0 0.0
        %500 = vmatprep.subr.mxu0 0.0
        %501 = vmatpush2.xpose.msra.mxu0 0.0
        %502 = vmatprep.subr.mxu0 0.0
        %503 = vmatpush2.xpose.msra.mxu0 0.0
        %504 = vmatprep.subr.mxu0 0.0
        %505 = vmatpush2.xpose.msra.mxu0 0.0
        %506 = vmatprep.subr.mxu0 0.0
        %507 = vmatpush2.xpose.msra.mxu0 0.0
        %508 = vmatprep.subr.mxu0 0.0
        %509 = vmatpush2.xpose.msra.mxu0 0.0
        %510 = vmatprep.subr.mxu0 0.0
        %511 = vmatpush2.xpose.msra.mxu0 0.0
        %512 = vmatprep.subr.mxu0 0.0
        %513 = vmatpush2.xpose.msra.mxu0 0.0
        %514 = vmatprep.subr.mxu0 0.0
        %515 = vmatpush2.xpose.msra.mxu0 0.0
        %516 = vmatprep.subr.mxu0 0.0
        %517 = vmatpush2.xpose.msra.mxu0 0.0
        %518 = vmatprep.subr.mxu0 0.0
        %519 = vmatpush2.xpose.msra.mxu0 0.0
        %520 = vmatprep.subr.mxu0 0.0
        %521 = vmatpush2.xpose.msra.mxu0 0.0
        %522 = vmatprep.subr.mxu0 0.0
        %523 = vmatpush2.xpose.msra.mxu0 0.0
        %524 = vmatprep.subr.mxu0 0.0
        %525 = vmatpush2.xpose.msra.mxu0 0.0
        %526 = vmatprep.subr.mxu0 0.0
        %527 = vmatpush2.xpose.msra.mxu0 0.0
        %528 = vmatprep.mubr.f32.mxu0 0.0
        %v529 = vand.u32 %v200, 4294901760
        %v530 = vsub.f32 %v200, %v529
        %v531 = vand.u32 %v530, 4294901760
        %532 = vmatmul.mubr.f32.gmra.mxu0 %v531
        %v533 = vpop.f32.mrf.mxu0
        %v534 = vadd.f32 %v452, %v533
        %v535 = vpop.f32.mrf.mxu0
        %536 = vmatprep.mubr.f32.mxu0 0.0
        %v537 = vand.u32 %v203, 4294901760
        %v538 = vsub.f32 %v203, %v537
        %v539 = vand.u32 %v538, 4294901760
        %540 = vmatmul.mubr.f32.gmra.mxu0 %v539
        %v541 = vpop.f32.mrf.mxu0
        %v542 = vadd.f32 %v459, %v541
        %v543 = vpop.f32.mrf.mxu0
        %544 = vdwg.mxu0
        %545 = vmatprep.subr.mxu0 0.0
        %546 = vmatpush1.xpose.msra.mxu0 0.0
        %547 = vmatprep.subr.mxu0 0.0
        %548 = vmatpush1.xpose.msra.mxu0 0.0
        %549 = vmatprep.subr.mxu0 0.0
        %550 = vmatpush1.xpose.msra.mxu0 0.0
        %551 = vmatprep.subr.mxu0 0.0
        %552 = vmatpush1.xpose.msra.mxu0 0.0
        %553 = vmatprep.subr.mxu0 0.0
        %554 = vmatpush1.xpose.msra.mxu0 0.0
        %555 = vmatprep.subr.mxu0 0.0
        %556 = vmatpush1.xpose.msra.mxu0 0.0
        %557 = vmatprep.subr.mxu0 0.0
        %558 = vmatpush1.xpose.msra.mxu0 0.0
        %559 = vmatprep.subr.mxu0 0.0
        %560 = vmatpush1.xpose.msra.mxu0 0.0
        %561 = vmatprep.subr.mxu0 0.0
        %562 = vmatpush1.xpose.msra.mxu0 0.0
        %563 = vmatprep.subr.mxu0 0.0
        %564 = vmatpush1.xpose.msra.mxu0 0.0
        %565 = vmatprep.subr.mxu0 0.0
        %566 = vmatpush1.xpose.msra.mxu0 0.0
        %567 = vmatprep.subr.mxu0 0.0
        %568 = vmatpush1.xpose.msra.mxu0 0.0
        %569 = vmatprep.subr.mxu0 0.0
        %570 = vmatpush1.xpose.msra.mxu0 0.0
        %571 = vmatprep.subr.mxu0 0.0
        %572 = vmatpush1.xpose.msra.mxu0 0.0
        %573 = vmatprep.subr.mxu0 0.0
        %v574 = vand.u32 %v203, 4294901760
        %v575 = vsub.f32 %v203, %v574
        %v576 = vand.u32 %v575, 4294901760
        %577 = vmatpush1.xpose.msra.mxu0 %v576
        %578 = vmatprep.subr.mxu0 0.0
        %v579 = vand.u32 %v200, 4294901760
        %v580 = vsub.f32 %v200, %v579
        %v581 = vand.u32 %v580, 4294901760
        %582 = vmatpush1.xpose.msra.mxu0 %v581
        %583 = vmatprep.subr.mxu0 0.0
        %584 = vmatpush2.xpose.msra.mxu0 0.0
        %585 = vmatprep.subr.mxu0 0.0
        %586 = vmatpush2.xpose.msra.mxu0 0.0
        %587 = vmatprep.subr.mxu0 0.0
        %588 = vmatpush2.xpose.msra.mxu0 0.0
        %589 = vmatprep.subr.mxu0 0.0
        %590 = vmatpush2.xpose.msra.mxu0 0.0
        %591 = vmatprep.subr.mxu0 0.0
        %592 = vmatpush2.xpose.msra.mxu0 0.0
        %593 = vmatprep.subr.mxu0 0.0
        %594 = vmatpush2.xpose.msra.mxu0 0.0
        %595 = vmatprep.subr.mxu0 0.0
        %596 = vmatpush2.xpose.msra.mxu0 0.0
        %597 = vmatprep.subr.mxu0 0.0
        %598 = vmatpush2.xpose.msra.mxu0 0.0
        %599 = vmatprep.subr.mxu0 0.0
        %600 = vmatpush2.xpose.msra.mxu0 0.0
        %601 = vmatprep.subr.mxu0 0.0
        %602 = vmatpush2.xpose.msra.mxu0 0.0
        %603 = vmatprep.subr.mxu0 0.0
        %604 = vmatpush2.xpose.msra.mxu0 0.0
        %605 = vmatprep.subr.mxu0 0.0
        %606 = vmatpush2.xpose.msra.mxu0 0.0
        %607 = vmatprep.subr.mxu0 0.0
        %608 = vmatpush2.xpose.msra.mxu0 0.0
        %609 = vmatprep.subr.mxu0 0.0
        %610 = vmatpush2.xpose.msra.mxu0 0.0
        %611 = vmatprep.subr.mxu0 0.0
        %612 = vmatpush2.xpose.msra.mxu0 0.0
        %613 = vmatprep.subr.mxu0 0.0
        %614 = vmatpush2.xpose.msra.mxu0 0.0
        %615 = vmatprep.mubr.f32.mxu0 0.0
        %v616 = vand.u32 %v200, 4294901760
        %617 = vmatmul.mubr.f32.gmra.mxu0 %v616
        %v618 = vpop.f32.mrf.mxu0
        %v619 = vadd.f32 %v534, %v618
        %v620 = vpop.f32.mrf.mxu0
        %621 = vmatprep.mubr.f32.mxu0 0.0
        %v622 = vand.u32 %v203, 4294901760
        %623 = vmatmul.mubr.f32.gmra.mxu0 %v622
        %v624 = vpop.f32.mrf.mxu0
        %v625 = vadd.f32 %v542, %v624
        %v626 = vpop.f32.mrf.mxu0
        %627 = vdwg.mxu0
        %628 = vmatprep.subr.mxu0 0.0
        %629 = vmatpush1.xpose.msra.mxu0 0.0
        %630 = vmatprep.subr.mxu0 0.0
        %631 = vmatpush1.xpose.msra.mxu0 0.0
        %632 = vmatprep.subr.mxu0 0.0
        %633 = vmatpush1.xpose.msra.mxu0 0.0
        %634 = vmatprep.subr.mxu0 0.0
        %635 = vmatpush1.xpose.msra.mxu0 0.0
        %636 = vmatprep.subr.mxu0 0.0
        %637 = vmatpush1.xpose.msra.mxu0 0.0
        %638 = vmatprep.subr.mxu0 0.0
        %639 = vmatpush1.xpose.msra.mxu0 0.0
        %640 = vmatprep.subr.mxu0 0.0
        %641 = vmatpush1.xpose.msra.mxu0 0.0
        %642 = vmatprep.subr.mxu0 0.0
        %643 = vmatpush1.xpose.msra.mxu0 0.0
        %644 = vmatprep.subr.mxu0 0.0
        %645 = vmatpush1.xpose.msra.mxu0 0.0
        %646 = vmatprep.subr.mxu0 0.0
        %647 = vmatpush1.xpose.msra.mxu0 0.0
        %648 = vmatprep.subr.mxu0 0.0
        %649 = vmatpush1.xpose.msra.mxu0 0.0
        %650 = vmatprep.subr.mxu0 0.0
        %651 = vmatpush1.xpose.msra.mxu0 0.0
        %652 = vmatprep.subr.mxu0 0.0
        %653 = vmatpush1.xpose.msra.mxu0 0.0
        %654 = vmatprep.subr.mxu0 0.0
        %655 = vmatpush1.xpose.msra.mxu0 0.0
        %656 = vmatprep.subr.mxu0 0.0
        %v657 = vand.u32 %v203, 4294901760
        %658 = vmatpush1.xpose.msra.mxu0 %v657
        %659 = vmatprep.subr.mxu0 0.0
        %v660 = vand.u32 %v200, 4294901760
        %661 = vmatpush1.xpose.msra.mxu0 %v660
        %662 = vmatprep.subr.mxu0 0.0
        %663 = vmatpush2.xpose.msra.mxu0 0.0
        %664 = vmatprep.subr.mxu0 0.0
        %665 = vmatpush2.xpose.msra.mxu0 0.0
        %666 = vmatprep.subr.mxu0 0.0
        %667 = vmatpush2.xpose.msra.mxu0 0.0
        %668 = vmatprep.subr.mxu0 0.0
        %669 = vmatpush2.xpose.msra.mxu0 0.0
        %670 = vmatprep.subr.mxu0 0.0
        %671 = vmatpush2.xpose.msra.mxu0 0.0
        %672 = vmatprep.subr.mxu0 0.0
        %673 = vmatpush2.xpose.msra.mxu0 0.0
        %674 = vmatprep.subr.mxu0 0.0
        %675 = vmatpush2.xpose.msra.mxu0 0.0
        %676 = vmatprep.subr.mxu0 0.0
        %677 = vmatpush2.xpose.msra.mxu0 0.0
        %678 = vmatprep.subr.mxu0 0.0
        %679 = vmatpush2.xpose.msra.mxu0 0.0
        %680 = vmatprep.subr.mxu0 0.0
        %681 = vmatpush2.xpose.msra.mxu0 0.0
        %682 = vmatprep.subr.mxu0 0.0
        %683 = vmatpush2.xpose.msra.mxu0 0.0
        %684 = vmatprep.subr.mxu0 0.0
        %685 = vmatpush2.xpose.msra.mxu0 0.0
        %686 = vmatprep.subr.mxu0 0.0
        %687 = vmatpush2.xpose.msra.mxu0 0.0
        %688 = vmatprep.subr.mxu0 0.0
        %689 = vmatpush2.xpose.msra.mxu0 0.0
        %690 = vmatprep.subr.mxu0 0.0
        %691 = vmatpush2.xpose.msra.mxu0 0.0
        %692 = vmatprep.subr.mxu0 0.0
        %693 = vmatpush2.xpose.msra.mxu0 0.0
        %694 = vmatprep.mubr.f32.mxu0 0.0
        %v695 = vand.u32 %v200, 4294901760
        %696 = vmatmul.mubr.f32.gmra.mxu0 %v695
        %v697 = vpop.f32.mrf.mxu0
        %v698 = vadd.f32 %v619, %v697
        %v699 = vpop.f32.mrf.mxu0
        %700 = vmatprep.mubr.f32.mxu0 0.0
        %v701 = vand.u32 %v203, 4294901760
        %702 = vmatmul.mubr.f32.gmra.mxu0 %v701
        %v703 = vpop.f32.mrf.mxu0
        %v704 = vadd.f32 %v625, %v703
        %v705 = vpop.f32.mrf.mxu0
        %706 = vdwg.mxu0
        %v707 = vlaneseq
        %v708 = vshrl.u32 %v707, 7
        %v709 = vadd.s32 %v708, 8
        %v710 = vlaneseq
        %v711 = vand.u32 %v710, 127
        %vm712 = vcmp.eq.s32.totalorder %v708, %v711
        %vm713 = vcmp.eq.s32.totalorder %v709, %v711
        %vm714 = vcmp.lt.s32.totalorder %v711, 8
        %v715 = vsel %vm712, %v698, 0.0
        %v716 = vsel %vm713, %v704, 0.0
        %vm717 = vcmask 130048
        %v718 = vsel %vm717, %v715, 0.0
        %719 = vadd.xlane.f32.xlu0 %v718
        %v720 = vpop.xlane.xlu0 %719
        %v721 = vsel %vm717, %v716, 0.0
        %722 = vadd.xlane.f32.xlu0 %v721
        %v723 = vpop.xlane.xlu0 %722
        %v724 = vadd.f32 %v718, %v721
        %v725 = vrot.slane %v724, 4
        %v726 = vadd.f32 %v724, %v725
        %v727 = vrot.slane %v726, 2
        %v728 = vadd.f32 %v726, %v727
        %v729 = vrot.slane %v728, 1
        %v730 = vadd.f32 %v728, %v729
        %v731 = vadd.f32 %v720, %v730
        %v732 = vadd.f32 %v723, %v730
        %v733 = vmul.f32 %v698, 2.0
        %v734 = vmul.f32 %v704, 2.0
        %v735 = vsub.f32 %v731, %v733
        %v736 = vsub.f32 %v732, %v734
        %v737 = vmax.f32 %v735, 0.0
        %v738 = vmax.f32 %v736, 0.0
        %v739 = vsel %vm712, 0.0, %v737
        %v740 = vsel %vm713, 0.0, %v738
        %v741 = vmul.u32 %v711, 4
        %vm742 = vcmp.ge.s32.totalorder %v708, %v741
        %vm743 = vcmp.ge.s32.totalorder %v709, %v741
        %v744 = vadd.s32 %v741, 4
        %vm745 = vcmp.lt.s32.totalorder %v708, %v744
        %vm746 = vcmp.lt.s32.totalorder %v709, %v744
        %vm747 = vmand %vm742, %vm745
        %vm748 = vmand %vm743, %vm746
        %v749 = vsel %vm747, 1, 0
        %v750 = vsel %vm748, 1, 0
        %v751 = vcvt.s32.f32 %v749
        %v752 = vcvt.s32.f32 %v750
        %v753 = vadd.s32 %v741, 8
        %vm754 = vcmp.ge.s32.totalorder %v708, %v753
        %vm755 = vcmp.ge.s32.totalorder %v709, %v753
        %v756 = vadd.s32 %v753, 4
        %vm757 = vcmp.lt.s32.totalorder %v708, %v756
        %vm758 = vcmp.lt.s32.totalorder %v709, %v756
        %vm759 = vmand %vm754, %vm757
        %vm760 = vmand %vm755, %vm758
        %v761 = vsel %vm759, 1, 0
        %v762 = vsel %vm760, 1, 0
        %v763 = vcvt.s32.f32 %v761
        %v764 = vcvt.s32.f32 %v762
        %v765 = vadd.f32 %v751, %v763
        %v766 = vadd.f32 %v752, %v764
        %vm767 = vcmask 15360
        %v769 = vsel %vm767, %v765, 0
        %v772 = vsel %vm767, %v766, 0
        %774 = vmatprep.subr.mxu0 0.0
        %775 = vmatpush1.xpose.msra.mxu0 0.0
        %776 = vmatprep.subr.mxu0 0.0
        %777 = vmatpush1.xpose.msra.mxu0 0.0
        %778 = vmatprep.subr.mxu0 0.0
        %779 = vmatpush1.xpose.msra.mxu0 0.0
        %780 = vmatprep.subr.mxu0 0.0
        %781 = vmatpush1.xpose.msra.mxu0 0.0
        %782 = vmatprep.subr.mxu0 0.0
        %783 = vmatpush1.xpose.msra.mxu0 0.0
        %784 = vmatprep.subr.mxu0 0.0
        %785 = vmatpush1.xpose.msra.mxu0 0.0
        %786 = vmatprep.subr.mxu0 0.0
        %787 = vmatpush1.xpose.msra.mxu0 0.0
        %788 = vmatprep.subr.mxu0 0.0
        %789 = vmatpush1.xpose.msra.mxu0 0.0
        %790 = vmatprep.subr.mxu0 0.0
        %791 = vmatpush1.xpose.msra.mxu0 0.0
        %792 = vmatprep.subr.mxu0 0.0
        %793 = vmatpush1.xpose.msra.mxu0 0.0
        %794 = vmatprep.subr.mxu0 0.0
        %795 = vmatpush1.xpose.msra.mxu0 0.0
        %796 = vmatprep.subr.mxu0 0.0
        %797 = vmatpush1.xpose.msra.mxu0 0.0
        %798 = vmatprep.subr.mxu0 0.0
        %799 = vmatpush1.xpose.msra.mxu0 0.0
        %800 = vmatprep.subr.mxu0 0.0
        %801 = vmatpush1.xpose.msra.mxu0 0.0
        %802 = vmatprep.subr.mxu0 0.0
        %803 = vmatpush1.xpose.msra.mxu0 %v772
        %804 = vmatprep.subr.mxu0 0.0
        %805 = vmatpush1.xpose.msra.mxu0 %v769
        %806 = vmatprep.subr.mxu0 0.0
        %807 = vmatpush2.xpose.msra.mxu0 0.0
        %808 = vmatprep.subr.mxu0 0.0
        %809 = vmatpush2.xpose.msra.mxu0 0.0
        %810 = vmatprep.subr.mxu0 0.0
        %811 = vmatpush2.xpose.msra.mxu0 0.0
        %812 = vmatprep.subr.mxu0 0.0
        %813 = vmatpush2.xpose.msra.mxu0 0.0
        %814 = vmatprep.subr.mxu0 0.0
        %815 = vmatpush2.xpose.msra.mxu0 0.0
        %816 = vmatprep.subr.mxu0 0.0
        %817 = vmatpush2.xpose.msra.mxu0 0.0
        %818 = vmatprep.subr.mxu0 0.0
        %819 = vmatpush2.xpose.msra.mxu0 0.0
        %820 = vmatprep.subr.mxu0 0.0
        %821 = vmatpush2.xpose.msra.mxu0 0.0
        %822 = vmatprep.subr.mxu0 0.0
        %823 = vmatpush2.xpose.msra.mxu0 0.0
        %824 = vmatprep.subr.mxu0 0.0
        %825 = vmatpush2.xpose.msra.mxu0 0.0
        %826 = vmatprep.subr.mxu0 0.0
        %827 = vmatpush2.xpose.msra.mxu0 0.0
        %828 = vmatprep.subr.mxu0 0.0
        %829 = vmatpush2.xpose.msra.mxu0 0.0
        %830 = vmatprep.subr.mxu0 0.0
        %831 = vmatpush2.xpose.msra.mxu0 0.0
        %832 = vmatprep.subr.mxu0 0.0
        %833 = vmatpush2.xpose.msra.mxu0 0.0
        %834 = vmatprep.subr.mxu0 0.0
        %835 = vmatpush2.xpose.msra.mxu0 0.0
        %836 = vmatprep.subr.mxu0 0.0
        %837 = vmatpush2.xpose.msra.mxu0 0.0
        %838 = vmatprep.mubr.f32.mxu0 0.0
        %839 = vmatmul.mubr.f32.gmra.mxu0 %v769
        %v840 = vpop.f32.mrf.mxu0
        %v841 = vadd.f32 0.0, %v840
        %v842 = vpop.f32.mrf.mxu0
        %843 = vmatprep.mubr.f32.mxu0 0.0
        %844 = vmatmul.mubr.f32.gmra.mxu0 %v772
        %v845 = vpop.f32.mrf.mxu0
        %v846 = vadd.f32 0.0, %v845
        %v847 = vpop.f32.mrf.mxu0
        %848 = vdwg.mxu0
        %v849 = vmul.f32 %v739, %v841
        %v850 = vmul.f32 %v740, %v846
        %v851 = vsel %vm717, %v849, 0.0
        %852 = vadd.xlane.f32.xlu0 %v851
        %v853 = vpop.xlane.xlu0 %852
        %v854 = vsel %vm717, %v850, 0.0
        %855 = vadd.xlane.f32.xlu0 %v854
        %v856 = vpop.xlane.xlu0 %855
        %v857 = vmul.f32 %v765, %v853
        %v858 = vmul.f32 %v766, %v856
        %v859 = vsel %vm767, %v857, 0.0
        %v860 = vsel %vm767, %v858, 0.0
        %v861 = vadd.f32 %v859, %v860
        %v862 = vrot.slane %v861, 4
        %v863 = vadd.f32 %v861, %v862
        %v864 = vrot.slane %v863, 2
        %v865 = vadd.f32 %v863, %v864
        %v866 = vrot.slane %v865, 1
        %v867 = vadd.f32 %v865, %v866
        %v868 = vrcp.pop 56.0
        %v869 = vmul.f32 %v867, %v868
        %v870 = vrcp.pop 4.0
        %v871 = vmul.f32 %v869, %v870
        %v872 = vmul.f32 %v765, %v871
        %v873 = vmul.f32 %v766, %v871
        %v874 = vsel %vm767, %v872, 0.0
        %875 = vadd.xlane.f32.xlu0 %v874
        %v876 = vpop.xlane.xlu0 %875
        %v877 = vsel %vm767, %v873, 0.0
        %878 = vadd.xlane.f32.xlu0 %v877
        %v879 = vpop.xlane.xlu0 %878
        %v880 = vadd.f32 %v876, 1e-09
        %v881 = vadd.f32 %v879, 1e-09
        %v882 = vrcp.pop %v880
        %v883 = vmul.f32 -1.0, %v882
        %v884 = vrcp.pop %v881
        %v885 = vmul.f32 -1.0, %v884
        %v886 = vmul.f32 %v739, %v883
        %v887 = vmul.f32 %v740, %v885
        %v888 = vmul.f32 %v886, 1.442695
        %v889 = vpow.pop %v888
        %v890 = vmul.f32 %v887, 1.442695
        %v891 = vpow.pop %v890
        %v892 = vmul.f32 %v876, 2.0
        %v893 = vmul.f32 %v879, 2.0
        %v894 = vadd.f32 %v892, 1e-09
        %v895 = vadd.f32 %v893, 1e-09
        %v896 = vrcp.pop %v894
        %v897 = vmul.f32 -1.0, %v896
        %v898 = vrcp.pop %v895
        %v899 = vmul.f32 -1.0, %v898
        %v900 = vmul.f32 %v739, %v897
        %v901 = vmul.f32 %v740, %v899
        %v902 = vmul.f32 %v900, 1.442695
        %v903 = vpow.pop %v902
        %v904 = vmul.f32 %v901, 1.442695
        %v905 = vpow.pop %v904
        %v906 = vadd.f32 %v889, %v903
        %v907 = vadd.f32 %v891, %v905
        %v908 = vmul.f32 %v876, 4.0
        %v909 = vmul.f32 %v879, 4.0
        %v910 = vadd.f32 %v908, 1e-09
        %v911 = vadd.f32 %v909, 1e-09
        %v912 = vrcp.pop %v910
        %v913 = vmul.f32 -1.0, %v912
        %v914 = vrcp.pop %v911
        %v915 = vmul.f32 -1.0, %v914
        %v916 = vmul.f32 %v739, %v913
        %v917 = vmul.f32 %v740, %v915
        %v918 = vmul.f32 %v916, 1.442695
        %v919 = vpow.pop %v918
        %v920 = vmul.f32 %v917, 1.442695
        %v921 = vpow.pop %v920
        %v922 = vadd.f32 %v906, %v919
        %v923 = vadd.f32 %v907, %v921
        %v924 = vmul.f32 %v876, 8.0
        %v925 = vmul.f32 %v879, 8.0
        %v926 = vadd.f32 %v924, 1e-09
        %v927 = vadd.f32 %v925, 1e-09
        %v928 = vrcp.pop %v926
        %v929 = vmul.f32 -1.0, %v928
        %v930 = vrcp.pop %v927
        %v931 = vmul.f32 -1.0, %v930
        %v932 = vmul.f32 %v739, %v929
        %v933 = vmul.f32 %v740, %v931
        %v934 = vmul.f32 %v932, 1.442695
        %v935 = vpow.pop %v934
        %v936 = vmul.f32 %v933, 1.442695
        %v937 = vpow.pop %v936
        %v938 = vadd.f32 %v922, %v935
        %v939 = vadd.f32 %v923, %v937
        %v940 = vmul.f32 %v876, 16.0
        %v941 = vmul.f32 %v879, 16.0
        %v942 = vadd.f32 %v940, 1e-09
        %v943 = vadd.f32 %v941, 1e-09
        %v944 = vrcp.pop %v942
        %v945 = vmul.f32 -1.0, %v944
        %v946 = vrcp.pop %v943
        %v947 = vmul.f32 -1.0, %v946
        %v948 = vmul.f32 %v739, %v945
        %v949 = vmul.f32 %v740, %v947
        %v950 = vmul.f32 %v948, 1.442695
        %v951 = vpow.pop %v950
        %v952 = vmul.f32 %v949, 1.442695
        %v953 = vpow.pop %v952
        %v954 = vadd.f32 %v938, %v951
        %v955 = vadd.f32 %v939, %v953
        %v956 = vmul.f32 %v954, %v841
        %v957 = vmul.f32 %v955, %v846
        %v958 = vsel %vm717, %v956, 0.0
        %959 = vadd.xlane.f32.xlu0 %v958
        %v960 = vpop.xlane.xlu0 %959
        %v961 = vsel %vm717, %v957, 0.0
        %962 = vadd.xlane.f32.xlu0 %v961
        %v963 = vpop.xlane.xlu0 %962
        %v964 = vsel %vm714, %v956, 0.0
        %v965 = vsel %vm714, %v957, 0.0
        %v966 = vsel %vm717, %v964, 0.0
        %967 = vadd.xlane.f32.xlu0 %v966
        %v968 = vpop.xlane.xlu0 %967
        %v969 = vsel %vm717, %v965, 0.0
        %970 = vadd.xlane.f32.xlu0 %v969
        %v971 = vpop.xlane.xlu0 %970
        %v972 = vsub.f32 %v960, %v968
        %v973 = vsub.f32 %v963, %v971
        %v974 = vmul.f32 %v751, %v968
        %v975 = vmul.f32 %v752, %v971
        %v976 = vsel %vm767, %v974, 0.0
        %v977 = vsel %vm767, %v975, 0.0
        %v978 = vadd.f32 %v976, %v977
        %v979 = vrot.slane %v978, 4
        %v980 = vadd.f32 %v978, %v979
        %v981 = vrot.slane %v980, 2
        %v982 = vadd.f32 %v980, %v981
        %v983 = vrot.slane %v982, 1
        %v984 = vadd.f32 %v982, %v983
        %v985 = vmul.f32 %v751, %v972
        %v986 = vmul.f32 %v752, %v973
        %v987 = vsel %vm767, %v985, 0.0
        %v988 = vsel %vm767, %v986, 0.0
        %v989 = vadd.f32 %v987, %v988
        %v990 = vrot.slane %v989, 4
        %v991 = vadd.f32 %v989, %v990
        %v992 = vrot.slane %v991, 2
        %v993 = vadd.f32 %v991, %v992
        %v994 = vrot.slane %v993, 1
        %v995 = vadd.f32 %v993, %v994
        %v996 = vmul.f32 %v763, %v968
        %v997 = vmul.f32 %v764, %v971
        %v998 = vsel %vm767, %v996, 0.0
        %v999 = vsel %vm767, %v997, 0.0
        %v1000 = vadd.f32 %v998, %v999
        %v1001 = vrot.slane %v1000, 4
        %v1002 = vadd.f32 %v1000, %v1001
        %v1003 = vrot.slane %v1002, 2
        %v1004 = vadd.f32 %v1002, %v1003
        %v1005 = vrot.slane %v1004, 1
        %v1006 = vadd.f32 %v1004, %v1005
        %v1007 = vmul.f32 %v763, %v972
        %v1008 = vmul.f32 %v764, %v973
        %v1009 = vsel %vm767, %v1007, 0.0
        %v1010 = vsel %vm767, %v1008, 0.0
        %v1011 = vadd.f32 %v1009, %v1010
        %v1012 = vrot.slane %v1011, 4
        %v1013 = vadd.f32 %v1011, %v1012
        %v1014 = vrot.slane %v1013, 2
        %v1015 = vadd.f32 %v1013, %v1014
        %v1016 = vrot.slane %v1015, 1
        %v1017 = vadd.f32 %v1015, %v1016
        %v1018 = vmul.f32 %v984, 0.0625
        %v1019 = vmul.f32 %v1017, 0.0625
        %v1020 = vmul.f32 %v995, 0.0625
        %v1021 = vmul.f32 %v1006, 0.0625
        %v1022 = vadd.f32 %v1018, %v1019
        %v1023 = vsub.f32 %v1022, %v1020
        %v1024 = vsub.f32 %v1023, %v1021
        %v1025 = vsel %vm717, %v849, -inf
        %1026 = vmax.xlane.f32.xlu0 %v1025
        %v1027 = vpop.xlane.xlu0 %1026
        %v1028 = vsel %vm717, %v850, -inf
        %1029 = vmax.xlane.f32.xlu0 %v1028
        %v1030 = vpop.xlane.xlu0 %1029
        %v1031 = vmul.f32 %v765, %v1027
        %v1032 = vmul.f32 %v766, %v1030
        %v1033 = vsel %vm767, %v1031, -inf
        %v1034 = vsel %vm767, %v1032, -inf
        %v1035 = vmax.f32 %v1033, %v1034
        %v1036 = vrot.slane %v1035, 4
        %v1037 = vmax.f32 %v1035, %v1036
        %v1038 = vrot.slane %v1037, 2
        %v1039 = vmax.f32 %v1037, %v1038
        %v1040 = vrot.slane %v1039, 1
        %v1041 = vmax.f32 %v1039, %v1040
        %vm1042 = vcmask 1040384
        %v1043 = vsel %vm1042, %v1024, %v1018
        %vm1044 = vcmask 1041408
        %v1045 = vsel %vm1044, %v1043, %v1019
        %vm1046 = vcmask 1042432
        %v1047 = vsel %vm1046, %v1045, %v1020
        %vm1048 = vcmask 1043456
        %v1049 = vsel %vm1048, %v1047, %v1021
        %vm1050 = vcmask 1044480
        %v1051 = vsel %vm1050, %v1049, %v1041
        %vm1052 = vcmask 13312
        %1053 = vst.msk [vmem:[%s195] sm:$0x3f] %vm1052, %v1051
        %p1054 = scmp.lt.s32.totalorder %s19, 1
        %s1055 = scalar_select %p1054, %s19, 1
        %s1056 = smul.addr %s1055, 8
        %s1057 = scalar_lea.vmem %s2, %s1056
        // Predicated region
        $region37: #{tpu_custom_call.1} parent=27 // pred_check
          %p1058 = pneg %p89
        $region38: #{tpu_custom_call.1} parent=27 // pred_check_branch
          %1060 = sbr.rel (%p1058) target = $region40
        $region39: #{tpu_custom_call.1} parent=27 // pred_region
          _
        $region40: #{tpu_custom_call.1} parent=27 // pred_fallthru
          _
      $region28: #{tpu_custom_call.1} parent=5 // pred_fallthru
        _
      %p1061 = scmp.le.s32.totalorder 2, %s14
      // Predicated region
      $region41: #{tpu_custom_call.1} parent=5 // pred_check
        %p1062 = pneg %p1061
      $region42: #{tpu_custom_call.1} parent=5 // pred_check_branch
        %1064 = sbr.rel (%p1062) target = $region44
      $region43: #{tpu_custom_call.1} parent=5 // pred_region
        %s1065 = ssub.s32 %s14, 2
        // Predicated region
        $region45: #{tpu_custom_call.1} parent=43 // pred_check
          %p1066 = pneg %p95
        $region46: #{tpu_custom_call.1} parent=43 // pred_check_branch
          %1068 = sbr.rel (%p1066) target = $region48
        $region47: #{tpu_custom_call.1} parent=43 // pred_region
          %p1069 = scmp.lt.s32.totalorder %s20, 1
          %s1070 = scalar_select %p1069, %s20, 1
          %s1071 = smul.addr %s1070, 8
          %s1072 = scalar_lea.vmem %s2, %s1071
        $region48: #{tpu_custom_call.1} parent=43 // pred_fallthru
          _
      $region44: #{tpu_custom_call.1} parent=5 // pred_fallthru
        _
    $region6: #{tpu_custom_call.1} parent=1 // loop_footer
      %s18 = sadd.s32 1, %s14
    $region7: #{tpu_custom_call.1} parent=1 // loop_footer_branch
      %13 = sbr.rel target = $region3
    $region8: #{tpu_custom_call.1} parent=1 // loop_exit
      _
    %1073 = vsyncpa [#allocation3], 1
    %s1074 = scalar_lea.sflag [#allocation3], 1
    %1075 = vsyncpa %s1074, 1
    %1076 = vsyncpa [#allocation5], 1
    %s1077 = scalar_lea.sflag [#allocation5], 1
    %1078 = vsyncpa %s1077, 1

</llo_original>
